<compile_context>
chip_gen: v6e
topology: v6e:2x2x1
jax: 0.10.0
libtpu: 0.0.40
codegen_flags: <defaults>
</compile_context>

<pallas_src>
import jax
import jax.numpy as jnp
from jax import lax
from jax.experimental import pallas as pl
from jax.experimental.pallas import tpu as pltpu

# --- scaled-down config (original: n_embd=384, head_size=64, block_size=256) ---
N_EMBD = 48
HEAD_SIZE = 8
BATCH = 2
SEQ = 16                       # T <= block_size

LANE = 128
MASK_VALUE = -1e30             # large finite negative (robust vs -inf)


def _round_up(n, m):
    return (n + m - 1) // m * m


# --------------------------- kernel ------------------------------------------
def head_kernel(x_ref, w_ref, o_ref):
    """x_ref: (T, C) [squeezed batch] or (bblk, T, C).
       w_ref: (C, 3*HP) fused weights laid out [K | Q*scale | V], each head
              zero-padded to HP = 128 lanes.
       o_ref: (T, H) or (bblk, T, H)."""
    x = x_ref[...]
    batched = (x.ndim == 3)
    if batched:
        bblk, T, C = x.shape
        x2d = x.reshape(bblk * T, C)          # tall 2-D LHS for the MXU
    else:
        T, C = x.shape
        x2d = x

    hp = w_ref.shape[1] // 3
    h = o_ref.shape[-1]

    # Single fused QKV projection (Wq already carries the C**-0.5 scale).
    # bf16 inputs (x2d.astype(bf16), w.astype(bf16)) would cut MXU passes ~3x
    # if a ~1e-3 tolerance is acceptable; kept f32 to hold 1e-4.
    qkv = jnp.dot(x2d, w_ref[...], preferred_element_type=jnp.float32)
    # 128-lane-aligned static slices: no relayout.
    k = qkv[:, 0:hp]
    q = qkv[:, hp:2 * hp]
    v = qkv[:, 2 * hp:3 * hp]

    # Scores: contract the trailing head dim of q and k directly — no k.T is
    # ever materialized.  Padded lanes of q/k are zero, so the 128-wide
    # contraction equals the true head_size-wide one.
    if batched:
        k = k.reshape(bblk, T, hp)
        q = q.reshape(bblk, T, hp)
        v = v.reshape(bblk, T, hp)
        wei = jnp.einsum('btd,bsd->bts', q, k,
                         preferred_element_type=jnp.float32)   # (bblk, T, T)
    else:
        wei = jnp.einsum('td,sd->ts', q, k,
                         preferred_element_type=jnp.float32)   # (T, T)

    row = lax.broadcasted_iota(jnp.int32, (T, T), 0)
    col = lax.broadcasted_iota(jnp.int32, (T, T), 1)
    causal = row >= col
    if batched:
        causal = causal[None, :, :]
    wei = jnp.where(causal, wei, MASK_VALUE)

    # Row-wise softmax (diagonal never masked -> no fully-masked row).
    wei = wei - jnp.max(wei, axis=-1, keepdims=True)
    p = jnp.exp(wei)
    p = p * pl.reciprocal(jnp.sum(p, axis=-1, keepdims=True), approx=False)
    # TODO(synk): attention-weight dropout is train-time stochastic; identity
    # here (eval/inference semantics).

    if batched:
        out = jnp.einsum('bts,bsd->btd', p, v,
                         preferred_element_type=jnp.float32)   # (bblk, T, hp)
        o_ref[...] = out[..., :h].astype(o_ref.dtype)
    else:
        out = jnp.dot(p, v, preferred_element_type=jnp.float32)  # (T, hp)
        o_ref[...] = out[:, :h].astype(o_ref.dtype)


# --------------------------- wrapper ------------------------------------------
def prepare_head_weights(wk, wq, wv):
    """One-time (init-time) prep: fold the C**-0.5 score scale into Wq and pack
    Wk|Wq|Wv into a single lane-dense (C, 3*128) fused weight."""
    C, H = wk.shape
    scale = C ** -0.5            # module uses x.shape[-1] == n_embd == C
    hp = _round_up(H, LANE)
    w = jnp.zeros((C, 3 * hp), wk.dtype)
    w = w.at[:, 0:H].set(wk)
    w = w.at[:, hp:hp + H].set(wq * scale)
    w = w.at[:, 2 * hp:2 * hp + H].set(wv)
    return w


def head_forward(x, w_fused, head_size):
    B, T, C = x.shape
    assert w_fused.shape[0] == C and w_fused.shape[1] % 3 == 0

    # Grid strategy: v7x has 2 TensorCores/chip -> shard the batch across them
    # (bblk=1, squeezed batch dim).  Single-TC v5e/v6e: collapse a small batch
    # into one step; tile larger batches so x DMA pipelines against compute.
    kind = jax.devices()[0].device_kind.lower()
    if "v7" in kind:
        bblk = 1
    elif B <= 8:
        bblk = B
    else:
        bblk = next(c for c in (8, 4, 2, 1) if B % c == 0)
    assert B % bblk == 0
    grid = (B // bblk,)

    if bblk == 1:
        x_spec = pl.BlockSpec((pl.Squeezed(), T, C), lambda i: (i, 0, 0))
        o_spec = pl.BlockSpec((pl.Squeezed(), T, head_size), lambda i: (i, 0, 0))
    else:
        x_spec = pl.BlockSpec((bblk, T, C), lambda i: (i, 0, 0))
        o_spec = pl.BlockSpec((bblk, T, head_size), lambda i: (i, 0, 0))
    w_spec = pl.BlockSpec(w_fused.shape, lambda i: (0, 0))

    return pl.pallas_call(
        head_kernel,
        out_shape=jax.ShapeDtypeStruct((B, T, head_size), x.dtype),
        grid=grid,
        in_specs=[x_spec, w_spec],
        out_specs=o_spec,
        compiler_params=pltpu.CompilerParams(
            dimension_semantics=("parallel",)),
    )(x, w_fused)


# ---------------- pure-JAX reference (mirrors the PyTorch forward) ------------
def reference_head(x, wk, wq, wv):
    B, T, C = x.shape
    k = x @ wk
    q = x @ wq
    v = x @ wv
    wei = (q @ jnp.swapaxes(k, -1, -2)) * (C ** -0.5)
    causal = jnp.tril(jnp.ones((T, T), bool))
    wei = jnp.where(causal, wei, -jnp.inf)
    wei = jax.nn.softmax(wei, axis=-1)
    return wei @ v


if __name__ == "__main__":
    key = jax.random.PRNGKey(0)
    kx, kk, kq, kv = jax.random.split(key, 4)
    x = jax.random.normal(kx, (BATCH, SEQ, N_EMBD), jnp.float32)
    s = 0.05
    wk = s * jax.random.normal(kk, (N_EMBD, HEAD_SIZE), jnp.float32)
    wq = s * jax.random.normal(kq, (N_EMBD, HEAD_SIZE), jnp.float32)
    wv = s * jax.random.normal(kv, (N_EMBD, HEAD_SIZE), jnp.float32)

    # One-time parameter prep (init-time, out of the per-call hot path).
    w_fused = jax.block_until_ready(prepare_head_weights(wk, wq, wv))

    out = jax.block_until_ready(head_forward(x, w_fused, HEAD_SIZE))

    ref = reference_head(x, wk, wq, wv)
    assert out.shape == ref.shape, (out.shape, ref.shape)
    max_err = float(jnp.max(jnp.abs(out - ref)))
    assert jnp.allclose(out, ref, atol=1e-4, rtol=1e-4), max_err
    print("KERNEL_OK")
</pallas_src>

<mosaic_0001>
module attributes {stable_mosaic.version = 11 : i64} {
  func.func @head_kernel(%arg0: i32, %arg1: memref<2x16x48xf32, #tpu.memory_space<vmem>>, %arg2: memref<48x384xf32, #tpu.memory_space<vmem>>, %arg3: memref<2x16x8xf32, #tpu.memory_space<vmem>>) attributes {dimension_semantics = [#tpu.dimension_semantics<parallel>], iteration_bounds = array<i64: 1>, scalar_prefetch = 0 : i64, scratch_operands = 0 : i64, tpu.core_type = #tpu.core_type<tc>, window_params = [{transform_indices = @transform_0, window_bounds = array<i64: 2, 16, 48>}, {pipeline_mode = #tpu.pipeline_mode<synchronous>, transform_indices = @transform_1, window_bounds = array<i64: 48, 384>}, {transform_indices = @transform_2, window_bounds = array<i64: 2, 16, 8>}]} {
    %c0 = arith.constant 0 : index
    %c0_0 = arith.constant 0 : index
    %c0_1 = arith.constant 0 : index
    %0 = vector.load %arg1[%c0, %c0_0, %c0_1] : memref<2x16x48xf32, #tpu.memory_space<vmem>>, vector<2x16x48xf32>
    %1 = vector.shape_cast %0 : vector<2x16x48xf32> to vector<32x48xf32>
    %c0_2 = arith.constant 0 : index
    %c0_3 = arith.constant 0 : index
    %2 = vector.load %arg2[%c0_2, %c0_3] : memref<48x384xf32, #tpu.memory_space<vmem>>, vector<48x384xf32>
    %cst = arith.constant dense<0.000000e+00> : vector<32x384xf32>
    %3 = tpu.matmul %1, %2, %cst {dimension_numbers = #tpu.dot_dimension_numbers<[1], [0], [0], [1], [0, 0, 1, 1], [], []>} : vector<32x48xf32>, vector<48x384xf32>, vector<32x384xf32> -> vector<32x384xf32>
    %4 = vector.extract_strided_slice %3 {offsets = [0, 0], sizes = [32, 128], strides = [1, 1]} : vector<32x384xf32> to vector<32x128xf32>
    %5 = vector.extract_strided_slice %3 {offsets = [0, 128], sizes = [32, 128], strides = [1, 1]} : vector<32x384xf32> to vector<32x128xf32>
    %6 = vector.extract_strided_slice %3 {offsets = [0, 256], sizes = [32, 128], strides = [1, 1]} : vector<32x384xf32> to vector<32x128xf32>
    %7 = vector.shape_cast %4 : vector<32x128xf32> to vector<2x16x128xf32>
    %8 = vector.shape_cast %5 : vector<32x128xf32> to vector<2x16x128xf32>
    %9 = vector.shape_cast %6 : vector<32x128xf32> to vector<2x16x128xf32>
    "tpu.trace_start"() <{level = 10 : i32, message = "btd,bsd->bts"}> : () -> ()
    %cst_4 = arith.constant dense<0.000000e+00> : vector<2x16x16xf32>
    %10 = tpu.matmul %8, %7, %cst_4 {dimension_numbers = #tpu.dot_dimension_numbers<[2], [2], [1], [1], [0, 0, 0, 1, 1, 1], [0], [0]>} : vector<2x16x128xf32>, vector<2x16x128xf32>, vector<2x16x16xf32> -> vector<2x16x16xf32>
    "tpu.trace_stop"() : () -> ()
    %11 = tpu.iota {dimensions = array<i32: 0>} : vector<16x16xi32>
    %12 = tpu.iota {dimensions = array<i32: 1>} : vector<16x16xi32>
    %13 = arith.cmpi sge, %11, %12 : vector<16x16xi32>
    %14 = vector.shape_cast %13 : vector<16x16xi1> to vector<1x16x16xi1>
    %cst_5 = arith.constant -1.000000e+30 : f32
    %15 = vector.shape_cast %14 : vector<1x16x16xi1> to vector<1x16x16xi1>
    %16 = vector.broadcast %15 : vector<1x16x16xi1> to vector<2x16x16xi1>
    %17 = vector.broadcast %cst_5 : f32 to vector<2x16x16xf32>
    %18 = arith.select %16, %10, %17 : vector<2x16x16xi1>, vector<2x16x16xf32>
    %cst_6 = arith.constant dense<0xFF800000> : vector<2x16xf32>
    %19 = vector.multi_reduction <maximumf>, %18, %cst_6 [2] : vector<2x16x16xf32> to vector<2x16xf32>
    %20 = vector.shape_cast %19 : vector<2x16xf32> to vector<2x16x1xf32>
    %21 = vector.broadcast %20 : vector<2x16x1xf32> to vector<2x16x16xf32>
    %22 = arith.subf %18, %21 : vector<2x16x16xf32>
    %23 = math.exp %22 : vector<2x16x16xf32>
    %cst_7 = arith.constant dense<0.000000e+00> : vector<2x16xf32>
    %24 = vector.multi_reduction <add>, %23, %cst_7 [2] : vector<2x16x16xf32> to vector<2x16xf32>
    %25 = vector.shape_cast %24 : vector<2x16xf32> to vector<2x16x1xf32>
    %26 = tpu.reciprocal %25 : vector<2x16x1xf32> -> vector<2x16x1xf32>
    %27 = vector.broadcast %26 : vector<2x16x1xf32> to vector<2x16x16xf32>
    %28 = arith.mulf %23, %27 : vector<2x16x16xf32>
    "tpu.trace_start"() <{level = 10 : i32, message = "bts,bsd->btd"}> : () -> ()
    %cst_8 = arith.constant dense<0.000000e+00> : vector<2x16x128xf32>
    %29 = tpu.matmul %28, %9, %cst_8 {dimension_numbers = #tpu.dot_dimension_numbers<[2], [1], [1], [2], [0, 0, 0, 1, 1, 2], [0], [0]>} : vector<2x16x16xf32>, vector<2x16x128xf32>, vector<2x16x128xf32> -> vector<2x16x128xf32>
    "tpu.trace_stop"() : () -> ()
    %30 = vector.extract_strided_slice %29 {offsets = [0, 0, 0], sizes = [2, 16, 8], strides = [1, 1, 1]} : vector<2x16x128xf32> to vector<2x16x8xf32>
    %c0_9 = arith.constant 0 : index
    %c0_10 = arith.constant 0 : index
    %c0_11 = arith.constant 0 : index
    %31 = vector.load %arg3[%c0_9, %c0_10, %c0_11] : memref<2x16x8xf32, #tpu.memory_space<vmem>>, vector<2x16x8xf32>
    tpu.vector_store %arg3[%c0_9, %c0_10, %c0_11], %30 {strides = array<i32>} : memref<2x16x8xf32, #tpu.memory_space<vmem>>, vector<2x16x8xf32>,
    return
  }
  func.func @transform_0(%arg0: i32) -> (i32, i32, i32) {
    %c0_i32 = arith.constant 0 : i32
    %c0_i32_0 = arith.constant 0 : i32
    %c0_i32_1 = arith.constant 0 : i32
    return %arg0, %c0_i32, %c0_i32_0 : i32, i32, i32
  }
  func.func @transform_1(%arg0: i32) -> (i32, i32) {
    %c0_i32 = arith.constant 0 : i32
    %c0_i32_0 = arith.constant 0 : i32
    %c0_i32_1 = arith.constant 0 : i32
    return %c0_i32, %c0_i32_0 : i32, i32
  }
  func.func @transform_2(%arg0: i32) -> (i32, i32, i32) {
    %c0_i32 = arith.constant 0 : i32
    %c0_i32_0 = arith.constant 0 : i32
    %c0_i32_1 = arith.constant 0 : i32
    return %arg0, %c0_i32, %c0_i32_0 : i32, i32, i32
  }
}

</mosaic_0001>

<llo_original>
// kernel: tpu_custom_call.1
$region0: #{tpu_custom_call.1}
  #allocation0 [shape = 'u32[]', space=smem, size = 0x4, offset = 0x4, fixed_abs, tag = 'smem constant byte address 0x4 - core index']
  #allocation1 [shape = 'u32[144,128]{1,0:T(1,128)}', space=vmem, size = 0x12000, scoped, tag = 'internal scratch']
  %s0 = inlined_call_operand.hbm [shape: f32[2,16,48], index: 0, kind: input, shape index: {}]
  %s1 = inlined_call_operand.hbm [shape: f32[48,384], index: 1, kind: input, shape index: {}]
  %s2 = inlined_call_operand.vmem [shape: f32[2,16,8], index: 2, kind: output, shape index: {}]
  %s3 = sld [smem:[#allocation0]]
  $region26: #{tpu_custom_call.1} parent=0
    _
  %s5 = ssub.s32 1, %s3
  %s6 = scalar_select 0, %s5, %s3
  $region1: #{tpu_custom_call.1} parent=0
    #allocation2 [shape = 'u8[16384]{0}', space=vmem, size = 0x4000, scoped, tag = 'input window, operand 0, single buffered']
    #allocation3 [shape = 's32[1]{0}', space=sflag, size = 0x4, scoped, tag = 'scoped memory for tpu_custom_call.1']
    #allocation4 [shape = 'u8[73728]{0}', space=vmem, size = 0x12000, scoped, tag = 'input window, operand 1, single buffered']
    #allocation5 [shape = 's32[1]{0}', space=sflag, size = 0x4, scoped, tag = 'scoped memory for tpu_custom_call.1']
    %7 = vsyncpa [#allocation3], 0
    %8 = vsyncpa [#allocation5], 0
    // Predicated region
    $region2: #{tpu_custom_call.1} parent=1 // pred_check
      _
    $region3: #{tpu_custom_call.1} parent=1 // pred_check_branch
      %10 = sbr.rel (0) target = $region5
    $region4: #{tpu_custom_call.1} parent=1 // pred_region
      %s12 = ssub.s32 512, 512
      %13 = vsyncadd [#allocation3], %s12
      %s14 = sshll.u32 [#allocation2], 4
      %s15 = int_to_ptr.vmem [resolvable:$true] %s14
      %20 = dma.hbm_to_vmem [thread:$0]  %s0, 512, %s15, [#allocation3], 128, 128, 8
    $region5: #{tpu_custom_call.1} parent=1 // pred_fallthru
      _
    // Predicated region
    $region6: #{tpu_custom_call.1} parent=1 // pred_check
      _
    $region7: #{tpu_custom_call.1} parent=1 // pred_check_branch
      %22 = sbr.rel (0) target = $region9
    $region8: #{tpu_custom_call.1} parent=1 // pred_region
      %s24 = ssub.s32 2304, 2304
      %25 = vsyncadd [#allocation5], %s24
      %s26 = sshll.u32 [#allocation4], 4
      %s27 = int_to_ptr.vmem [resolvable:$true] %s26
      %32 = dma.hbm_to_vmem [thread:$0]  %s1, 2304, %s27, [#allocation5], 384, 384, 24
    $region9: #{tpu_custom_call.1} parent=1 // pred_fallthru
      _
    // Predicated region
    $region10: #{tpu_custom_call.1} parent=1 // pred_check
      _
    $region11: #{tpu_custom_call.1} parent=1 // pred_check_branch
      %34 = sbr.rel (0) target = $region13
    $region12: #{tpu_custom_call.1} parent=1 // pred_region
      %35 = dma.done [#allocation3], 512
    $region13: #{tpu_custom_call.1} parent=1 // pred_fallthru
      _
    // Predicated region
    $region14: #{tpu_custom_call.1} parent=1 // pred_check
      _
    $region15: #{tpu_custom_call.1} parent=1 // pred_check_branch
      %37 = sbr.rel (0) target = $region17
    $region16: #{tpu_custom_call.1} parent=1 // pred_region
      %38 = dma.done [#allocation5], 2304
    $region17: #{tpu_custom_call.1} parent=1 // pred_fallthru
      _
    %v39 = vld [vmem:[#allocation2] sm:$0xff]
    %v40 = vld [vmem:[#allocation2 + $0x8] sm:$0xff]
    %v41 = vld [vmem:[#allocation2 + $0x10] sm:$0xff]
    %v42 = vld [vmem:[#allocation2 + $0x18] sm:$0xff]
    %v43 = vld [vmem:[#allocation4] sm:$0xff]
    %v44 = vld [vmem:[#allocation4 + $0x8] sm:$0xff]
    %v45 = vld [vmem:[#allocation4 + $0x10] sm:$0xff]
    %v46 = vld [vmem:[#allocation4 + $0x18] sm:$0xff]
    %v47 = vld [vmem:[#allocation4 + $0x20] sm:$0xff]
    %v48 = vld [vmem:[#allocation4 + $0x28] sm:$0xff]
    %v49 = vld [vmem:[#allocation4 + $0x30] sm:$0xff]
    %v50 = vld [vmem:[#allocation4 + $0x38] sm:$0xff]
    %v51 = vld [vmem:[#allocation4 + $0x40] sm:$0xff]
    %v52 = vld [vmem:[#allocation4 + $0x48] sm:$0xff]
    %v53 = vld [vmem:[#allocation4 + $0x50] sm:$0xff]
    %v54 = vld [vmem:[#allocation4 + $0x58] sm:$0xff]
    %v55 = vld [vmem:[#allocation4 + $0x60] sm:$0xff]
    %v56 = vld [vmem:[#allocation4 + $0x68] sm:$0xff]
    %v57 = vld [vmem:[#allocation4 + $0x70] sm:$0xff]
    %v58 = vld [vmem:[#allocation4 + $0x78] sm:$0xff]
    %v59 = vld [vmem:[#allocation4 + $0x80] sm:$0xff]
    %v60 = vld [vmem:[#allocation4 + $0x88] sm:$0xff]
    %vm61 = vcmask 392192
    %v63 = vsel %vm61, %v39, 0
    %v66 = vsel %vm61, %v40, 0
    %v69 = vsel %vm61, %v41, 0
    %v72 = vsel %vm61, %v42, 0
    %74 = vmatprep.subr.mxu0 0.0
    %75 = vmatpush1.msra.mxu0 0.0
    %76 = vmatprep.subr.mxu0 0.0
    %77 = vmatpush1.msra.mxu0 0.0
    %78 = vmatprep.subr.mxu0 0.0
    %79 = vmatpush1.msra.mxu0 0.0
    %80 = vmatprep.subr.mxu0 0.0
    %81 = vmatpush1.msra.mxu0 0.0
    %82 = vmatprep.subr.mxu0 0.0
    %83 = vmatpush1.msra.mxu0 0.0
    %84 = vmatprep.subr.mxu0 0.0
    %85 = vmatpush1.msra.mxu0 0.0
    %86 = vmatprep.subr.mxu0 0.0
    %87 = vmatpush1.msra.mxu0 0.0
    %88 = vmatprep.subr.mxu0 0.0
    %89 = vmatpush1.msra.mxu0 0.0
    %90 = vmatprep.subr.mxu0 0.0
    %91 = vmatpush1.msra.mxu0 0.0
    %92 = vmatprep.subr.mxu0 0.0
    %93 = vmatpush1.msra.mxu0 0.0
    %94 = vmatprep.subr.mxu0 %v59
    %95 = vmatpush1.msra.mxu0 %v58
    %96 = vmatprep.subr.mxu0 %v56
    %97 = vmatpush1.msra.mxu0 %v55
    %98 = vmatprep.subr.mxu0 %v53
    %99 = vmatpush1.msra.mxu0 %v52
    %100 = vmatprep.subr.mxu0 %v50
    %101 = vmatpush1.msra.mxu0 %v49
    %102 = vmatprep.subr.mxu0 %v47
    %103 = vmatpush1.msra.mxu0 %v46
    %104 = vmatprep.subr.mxu0 %v44
    %105 = vmatpush1.msra.mxu0 %v43
    %106 = vmatprep.subr.mxu0 0.0
    %107 = vmatpush2.msra.mxu0 0.0
    %108 = vmatprep.subr.mxu0 0.0
    %109 = vmatpush2.msra.mxu0 0.0
    %110 = vmatprep.subr.mxu0 0.0
    %111 = vmatpush2.msra.mxu0 0.0
    %112 = vmatprep.subr.mxu0 0.0
    %113 = vmatpush2.msra.mxu0 0.0
    %114 = vmatprep.subr.mxu0 0.0
    %115 = vmatpush2.msra.mxu0 0.0
    %116 = vmatprep.subr.mxu0 0.0
    %117 = vmatpush2.msra.mxu0 0.0
    %118 = vmatprep.subr.mxu0 0.0
    %119 = vmatpush2.msra.mxu0 0.0
    %120 = vmatprep.subr.mxu0 0.0
    %121 = vmatpush2.msra.mxu0 0.0
    %122 = vmatprep.subr.mxu0 0.0
    %123 = vmatpush2.msra.mxu0 0.0
    %124 = vmatprep.subr.mxu0 0.0
    %125 = vmatpush2.msra.mxu0 0.0
    %126 = vmatprep.subr.mxu0 0.0
    %127 = vmatpush2.msra.mxu0 0.0
    %128 = vmatprep.subr.mxu0 0.0
    %129 = vmatpush2.msra.mxu0 0.0
    %130 = vmatprep.subr.mxu0 0.0
    %131 = vmatpush2.msra.mxu0 0.0
    %132 = vmatprep.subr.mxu0 0.0
    %133 = vmatpush2.msra.mxu0 0.0
    %134 = vmatprep.subr.mxu0 0.0
    %135 = vmatpush2.msra.mxu0 0.0
    %136 = vmatprep.subr.mxu0 0.0
    %137 = vmatpush2.msra.mxu0 0.0
    %138 = vmatprep.mubr.f32.mxu0 0.0
    %139 = vmatmul.mubr.f32.gmra.mxu0 %v63
    %v140 = vpop.f32.mrf.mxu0
    %v141 = vadd.f32 0.0, %v140
    %v142 = vpop.f32.mrf.mxu0
    %v143 = vadd.f32 0.0, %v142
    %144 = vmatprep.mubr.f32.mxu0 0.0
    %145 = vmatmul.mubr.f32.gmra.mxu0 %v66
    %v146 = vpop.f32.mrf.mxu0
    %v147 = vadd.f32 0.0, %v146
    %v148 = vpop.f32.mrf.mxu0
    %v149 = vadd.f32 0.0, %v148
    %150 = vmatprep.mubr.f32.mxu0 0.0
    %151 = vmatmul.mubr.f32.gmra.mxu0 %v69
    %v152 = vpop.f32.mrf.mxu0
    %v153 = vadd.f32 0.0, %v152
    %v154 = vpop.f32.mrf.mxu0
    %v155 = vadd.f32 0.0, %v154
    %156 = vmatprep.mubr.f32.mxu0 0.0
    %157 = vmatmul.mubr.f32.gmra.mxu0 %v72
    %v158 = vpop.f32.mrf.mxu0
    %v159 = vadd.f32 0.0, %v158
    %v160 = vpop.f32.mrf.mxu0
    %v161 = vadd.f32 0.0, %v160
    %162 = vdwg.mxu0
    %163 = vmatprep.subr.mxu0 0.0
    %164 = vmatpush1.msra.mxu0 0.0
    %165 = vmatprep.subr.mxu0 0.0
    %166 = vmatpush1.msra.mxu0 0.0
    %167 = vmatprep.subr.mxu0 0.0
    %168 = vmatpush1.msra.mxu0 0.0
    %169 = vmatprep.subr.mxu0 0.0
    %170 = vmatpush1.msra.mxu0 0.0
    %171 = vmatprep.subr.mxu0 0.0
    %172 = vmatpush1.msra.mxu0 0.0
    %173 = vmatprep.subr.mxu0 0.0
    %174 = vmatpush1.msra.mxu0 0.0
    %175 = vmatprep.subr.mxu0 0.0
    %176 = vmatpush1.msra.mxu0 0.0
    %177 = vmatprep.subr.mxu0 0.0
    %178 = vmatpush1.msra.mxu0 0.0
    %179 = vmatprep.subr.mxu0 0.0
    %180 = vmatpush1.msra.mxu0 0.0
    %181 = vmatprep.subr.mxu0 0.0
    %182 = vmatpush1.msra.mxu0 0.0
    %183 = vmatprep.subr.mxu0 0.0
    %184 = vmatpush1.msra.mxu0 %v60
    %185 = vmatprep.subr.mxu0 0.0
    %186 = vmatpush1.msra.mxu0 %v57
    %187 = vmatprep.subr.mxu0 0.0
    %188 = vmatpush1.msra.mxu0 %v54
    %189 = vmatprep.subr.mxu0 0.0
    %190 = vmatpush1.msra.mxu0 %v51
    %191 = vmatprep.subr.mxu0 0.0
    %192 = vmatpush1.msra.mxu0 %v48
    %193 = vmatprep.subr.mxu0 0.0
    %194 = vmatpush1.msra.mxu0 %v45
    %195 = vmatprep.subr.mxu0 0.0
    %196 = vmatpush2.msra.mxu0 0.0
    %197 = vmatprep.subr.mxu0 0.0
    %198 = vmatpush2.msra.mxu0 0.0
    %199 = vmatprep.subr.mxu0 0.0
    %200 = vmatpush2.msra.mxu0 0.0
    %201 = vmatprep.subr.mxu0 0.0
    %202 = vmatpush2.msra.mxu0 0.0
    %203 = vmatprep.subr.mxu0 0.0
    %204 = vmatpush2.msra.mxu0 0.0
    %205 = vmatprep.subr.mxu0 0.0
    %206 = vmatpush2.msra.mxu0 0.0
    %207 = vmatprep.subr.mxu0 0.0
    %208 = vmatpush2.msra.mxu0 0.0
    %209 = vmatprep.subr.mxu0 0.0
    %210 = vmatpush2.msra.mxu0 0.0
    %211 = vmatprep.subr.mxu0 0.0
    %212 = vmatpush2.msra.mxu0 0.0
    %213 = vmatprep.subr.mxu0 0.0
    %214 = vmatpush2.msra.mxu0 0.0
    %215 = vmatprep.subr.mxu0 0.0
    %216 = vmatpush2.msra.mxu0 0.0
    %217 = vmatprep.subr.mxu0 0.0
    %218 = vmatpush2.msra.mxu0 0.0
    %219 = vmatprep.subr.mxu0 0.0
    %220 = vmatpush2.msra.mxu0 0.0
    %221 = vmatprep.subr.mxu0 0.0
    %222 = vmatpush2.msra.mxu0 0.0
    %223 = vmatprep.subr.mxu0 0.0
    %224 = vmatpush2.msra.mxu0 0.0
    %225 = vmatprep.subr.mxu0 0.0
    %226 = vmatpush2.msra.mxu0 0.0
    %227 = vmatprep.mubr.f32.mxu0 0.0
    %228 = vmatmul.mubr.f32.gmra.mxu0 %v63
    %v229 = vpop.f32.mrf.mxu0
    %v230 = vadd.f32 0.0, %v229
    %v231 = vpop.f32.mrf.mxu0
    %232 = vmatprep.mubr.f32.mxu0 0.0
    %233 = vmatmul.mubr.f32.gmra.mxu0 %v66
    %v234 = vpop.f32.mrf.mxu0
    %v235 = vadd.f32 0.0, %v234
    %v236 = vpop.f32.mrf.mxu0
    %237 = vmatprep.mubr.f32.mxu0 0.0
    %238 = vmatmul.mubr.f32.gmra.mxu0 %v69
    %v239 = vpop.f32.mrf.mxu0
    %v240 = vadd.f32 0.0, %v239
    %v241 = vpop.f32.mrf.mxu0
    %242 = vmatprep.mubr.f32.mxu0 0.0
    %243 = vmatmul.mubr.f32.gmra.mxu0 %v72
    %v244 = vpop.f32.mrf.mxu0
    %v245 = vadd.f32 0.0, %v244
    %v246 = vpop.f32.mrf.mxu0
    %247 = vdwg.mxu0
    %248 = vmatprep.subr.mxu0 0.0
    %249 = vmatpush1.xpose.msra.mxu0 0.0
    %250 = vmatprep.subr.mxu0 0.0
    %251 = vmatpush1.xpose.msra.mxu0 0.0
    %252 = vmatprep.subr.mxu0 0.0
    %253 = vmatpush1.xpose.msra.mxu0 0.0
    %254 = vmatprep.subr.mxu0 0.0
    %255 = vmatpush1.xpose.msra.mxu0 0.0
    %256 = vmatprep.subr.mxu0 0.0
    %257 = vmatpush1.xpose.msra.mxu0 0.0
    %258 = vmatprep.subr.mxu0 0.0
    %259 = vmatpush1.xpose.msra.mxu0 0.0
    %260 = vmatprep.subr.mxu0 0.0
    %261 = vmatpush1.xpose.msra.mxu0 0.0
    %262 = vmatprep.subr.mxu0 0.0
    %263 = vmatpush1.xpose.msra.mxu0 0.0
    %264 = vmatprep.subr.mxu0 0.0
    %265 = vmatpush1.xpose.msra.mxu0 0.0
    %266 = vmatprep.subr.mxu0 0.0
    %267 = vmatpush1.xpose.msra.mxu0 0.0
    %268 = vmatprep.subr.mxu0 0.0
    %269 = vmatpush1.xpose.msra.mxu0 0.0
    %270 = vmatprep.subr.mxu0 0.0
    %271 = vmatpush1.xpose.msra.mxu0 0.0
    %272 = vmatprep.subr.mxu0 0.0
    %273 = vmatpush1.xpose.msra.mxu0 0.0
    %274 = vmatprep.subr.mxu0 0.0
    %275 = vmatpush1.xpose.msra.mxu0 0.0
    %276 = vmatprep.subr.mxu0 0.0
    %277 = vmatpush1.xpose.msra.mxu0 %v147
    %278 = vmatprep.subr.mxu0 0.0
    %279 = vmatpush1.xpose.msra.mxu0 %v141
    %280 = vmatprep.subr.mxu0 0.0
    %281 = vmatpush2.xpose.msra.mxu0 0.0
    %282 = vmatprep.subr.mxu0 0.0
    %283 = vmatpush2.xpose.msra.mxu0 0.0
    %284 = vmatprep.subr.mxu0 0.0
    %285 = vmatpush2.xpose.msra.mxu0 0.0
    %286 = vmatprep.subr.mxu0 0.0
    %287 = vmatpush2.xpose.msra.mxu0 0.0
    %288 = vmatprep.subr.mxu0 0.0
    %289 = vmatpush2.xpose.msra.mxu0 0.0
    %290 = vmatprep.subr.mxu0 0.0
    %291 = vmatpush2.xpose.msra.mxu0 0.0
    %292 = vmatprep.subr.mxu0 0.0
    %293 = vmatpush2.xpose.msra.mxu0 0.0
    %294 = vmatprep.subr.mxu0 0.0
    %295 = vmatpush2.xpose.msra.mxu0 0.0
    %296 = vmatprep.subr.mxu0 0.0
    %297 = vmatpush2.xpose.msra.mxu0 0.0
    %298 = vmatprep.subr.mxu0 0.0
    %299 = vmatpush2.xpose.msra.mxu0 0.0
    %300 = vmatprep.subr.mxu0 0.0
    %301 = vmatpush2.xpose.msra.mxu0 0.0
    %302 = vmatprep.subr.mxu0 0.0
    %303 = vmatpush2.xpose.msra.mxu0 0.0
    %304 = vmatprep.subr.mxu0 0.0
    %305 = vmatpush2.xpose.msra.mxu0 0.0
    %306 = vmatprep.subr.mxu0 0.0
    %307 = vmatpush2.xpose.msra.mxu0 0.0
    %308 = vmatprep.subr.mxu0 0.0
    %309 = vmatpush2.xpose.msra.mxu0 0.0
    %310 = vmatprep.subr.mxu0 0.0
    %311 = vmatpush2.xpose.msra.mxu0 0.0
    %312 = vmatprep.mubr.f32.mxu0 0.0
    %313 = vmatmul.mubr.f32.gmra.mxu0 %v143
    %v314 = vpop.f32.mrf.mxu0
    %v315 = vadd.f32 0.0, %v314
    %v316 = vpop.f32.mrf.mxu0
    %317 = vmatprep.mubr.f32.mxu0 0.0
    %318 = vmatmul.mubr.f32.gmra.mxu0 %v149
    %v319 = vpop.f32.mrf.mxu0
    %v320 = vadd.f32 0.0, %v319
    %v321 = vpop.f32.mrf.mxu0
    %322 = vdwg.mxu0
    %323 = vmatprep.subr.mxu0 0.0
    %324 = vmatpush1.xpose.msra.mxu0 0.0
    %325 = vmatprep.subr.mxu0 0.0
    %326 = vmatpush1.xpose.msra.mxu0 0.0
    %327 = vmatprep.subr.mxu0 0.0
    %328 = vmatpush1.xpose.msra.mxu0 0.0
    %329 = vmatprep.subr.mxu0 0.0
    %330 = vmatpush1.xpose.msra.mxu0 0.0
    %331 = vmatprep.subr.mxu0 0.0
    %332 = vmatpush1.xpose.msra.mxu0 0.0
    %333 = vmatprep.subr.mxu0 0.0
    %334 = vmatpush1.xpose.msra.mxu0 0.0
    %335 = vmatprep.subr.mxu0 0.0
    %336 = vmatpush1.xpose.msra.mxu0 0.0
    %337 = vmatprep.subr.mxu0 0.0
    %338 = vmatpush1.xpose.msra.mxu0 0.0
    %339 = vmatprep.subr.mxu0 0.0
    %340 = vmatpush1.xpose.msra.mxu0 0.0
    %341 = vmatprep.subr.mxu0 0.0
    %342 = vmatpush1.xpose.msra.mxu0 0.0
    %343 = vmatprep.subr.mxu0 0.0
    %344 = vmatpush1.xpose.msra.mxu0 0.0
    %345 = vmatprep.subr.mxu0 0.0
    %346 = vmatpush1.xpose.msra.mxu0 0.0
    %347 = vmatprep.subr.mxu0 0.0
    %348 = vmatpush1.xpose.msra.mxu0 0.0
    %349 = vmatprep.subr.mxu0 0.0
    %350 = vmatpush1.xpose.msra.mxu0 0.0
    %351 = vmatprep.subr.mxu0 0.0
    %352 = vmatpush1.xpose.msra.mxu0 %v159
    %353 = vmatprep.subr.mxu0 0.0
    %354 = vmatpush1.xpose.msra.mxu0 %v153
    %355 = vmatprep.subr.mxu0 0.0
    %356 = vmatpush2.xpose.msra.mxu0 0.0
    %357 = vmatprep.subr.mxu0 0.0
    %358 = vmatpush2.xpose.msra.mxu0 0.0
    %359 = vmatprep.subr.mxu0 0.0
    %360 = vmatpush2.xpose.msra.mxu0 0.0
    %361 = vmatprep.subr.mxu0 0.0
    %362 = vmatpush2.xpose.msra.mxu0 0.0
    %363 = vmatprep.subr.mxu0 0.0
    %364 = vmatpush2.xpose.msra.mxu0 0.0
    %365 = vmatprep.subr.mxu0 0.0
    %366 = vmatpush2.xpose.msra.mxu0 0.0
    %367 = vmatprep.subr.mxu0 0.0
    %368 = vmatpush2.xpose.msra.mxu0 0.0
    %369 = vmatprep.subr.mxu0 0.0
    %370 = vmatpush2.xpose.msra.mxu0 0.0
    %371 = vmatprep.subr.mxu0 0.0
    %372 = vmatpush2.xpose.msra.mxu0 0.0
    %373 = vmatprep.subr.mxu0 0.0
    %374 = vmatpush2.xpose.msra.mxu0 0.0
    %375 = vmatprep.subr.mxu0 0.0
    %376 = vmatpush2.xpose.msra.mxu0 0.0
    %377 = vmatprep.subr.mxu0 0.0
    %378 = vmatpush2.xpose.msra.mxu0 0.0
    %379 = vmatprep.subr.mxu0 0.0
    %380 = vmatpush2.xpose.msra.mxu0 0.0
    %381 = vmatprep.subr.mxu0 0.0
    %382 = vmatpush2.xpose.msra.mxu0 0.0
    %383 = vmatprep.subr.mxu0 0.0
    %384 = vmatpush2.xpose.msra.mxu0 0.0
    %385 = vmatprep.subr.mxu0 0.0
    %386 = vmatpush2.xpose.msra.mxu0 0.0
    %387 = vmatprep.mubr.f32.mxu0 0.0
    %388 = vmatmul.mubr.f32.gmra.mxu0 %v155
    %v389 = vpop.f32.mrf.mxu0
    %v390 = vadd.f32 0.0, %v389
    %v391 = vpop.f32.mrf.mxu0
    %392 = vmatprep.mubr.f32.mxu0 0.0
    %393 = vmatmul.mubr.f32.gmra.mxu0 %v161
    %v394 = vpop.f32.mrf.mxu0
    %v395 = vadd.f32 0.0, %v394
    %v396 = vpop.f32.mrf.mxu0
    %397 = vdwg.mxu0
    %v398 = vlaneseq
    %v399 = vshrl.u32 %v398, 7
    %v400 = vadd.s32 %v399, 8
    %v401 = vlaneseq
    %v402 = vand.u32 %v401, 127
    %vm403 = vcmp.ge.s32.totalorder %v399, %v402
    %vm404 = vcmp.ge.s32.totalorder %v400, %v402
    %v405 = vsel %vm403, 1, 0
    %v406 = vsel %vm404, 1, 0
    %vm407 = vcmp.eq.s32.totalorder %v405, 1
    %vm408 = vcmp.eq.s32.totalorder %v406, 1
    %v409 = vsel %vm407, %v315, -1e+30
    %v410 = vsel %vm408, %v320, -1e+30
    %v411 = vsel %vm407, %v390, -1e+30
    %v412 = vsel %vm408, %v395, -1e+30
    %vm413 = vcmask 130048
    %v414 = vsel %vm413, %v409, -inf
    %415 = vmax.xlane.f32.xlu0 %v414
    %v416 = vpop.xlane.xlu0 %415
    %v417 = vsel %vm413, %v410, -inf
    %418 = vmax.xlane.f32.xlu0 %v417
    %v419 = vpop.xlane.xlu0 %418
    %v420 = vsel %vm413, %v411, -inf
    %421 = vmax.xlane.f32.xlu0 %v420
    %v422 = vpop.xlane.xlu0 %421
    %v423 = vsel %vm413, %v412, -inf
    %424 = vmax.xlane.f32.xlu0 %v423
    %v425 = vpop.xlane.xlu0 %424
    %v426 = vsub.f32 %v409, %v416
    %v427 = vsub.f32 %v410, %v419
    %v428 = vsub.f32 %v411, %v422
    %v429 = vsub.f32 %v412, %v425
    %v430 = vmul.f32 %v426, 1.442695
    %v431 = vpow.pop %v430
    %v432 = vmul.f32 %v427, 1.442695
    %v433 = vpow.pop %v432
    %v434 = vmul.f32 %v428, 1.442695
    %v435 = vpow.pop %v434
    %v436 = vmul.f32 %v429, 1.442695
    %v437 = vpow.pop %v436
    %v438 = vsel %vm413, %v431, 0.0
    %439 = vadd.xlane.f32.xlu0 %v438
    %v440 = vpop.xlane.xlu0 %439
    %v441 = vsel %vm413, %v433, 0.0
    %442 = vadd.xlane.f32.xlu0 %v441
    %v443 = vpop.xlane.xlu0 %442
    %v444 = vsel %vm413, %v435, 0.0
    %445 = vadd.xlane.f32.xlu0 %v444
    %v446 = vpop.xlane.xlu0 %445
    %v447 = vsel %vm413, %v437, 0.0
    %448 = vadd.xlane.f32.xlu0 %v447
    %v449 = vpop.xlane.xlu0 %448
    %v450 = vrcp.pop %v440
    %v451 = vrcp.pop %v443
    %v452 = vrcp.pop %v446
    %v453 = vrcp.pop %v449
    %v454 = vmul.f32 %v431, %v450
    %v455 = vmul.f32 %v433, %v451
    %v456 = vmul.f32 %v435, %v452
    %v457 = vmul.f32 %v437, %v453
    %v459 = vsel %vm413, %v454, 0
    %v462 = vsel %vm413, %v455, 0
    %464 = vmatprep.subr.mxu0 0.0
    %465 = vmatpush1.msra.mxu0 0.0
    %466 = vmatprep.subr.mxu0 0.0
    %467 = vmatpush1.msra.mxu0 0.0
    %468 = vmatprep.subr.mxu0 0.0
    %469 = vmatpush1.msra.mxu0 0.0
    %470 = vmatprep.subr.mxu0 0.0
    %471 = vmatpush1.msra.mxu0 0.0
    %472 = vmatprep.subr.mxu0 0.0
    %473 = vmatpush1.msra.mxu0 0.0
    %474 = vmatprep.subr.mxu0 0.0
    %475 = vmatpush1.msra.mxu0 0.0
    %476 = vmatprep.subr.mxu0 0.0
    %477 = vmatpush1.msra.mxu0 0.0
    %478 = vmatprep.subr.mxu0 0.0
    %479 = vmatpush1.msra.mxu0 0.0
    %480 = vmatprep.subr.mxu0 0.0
    %481 = vmatpush1.msra.mxu0 0.0
    %482 = vmatprep.subr.mxu0 0.0
    %483 = vmatpush1.msra.mxu0 0.0
    %484 = vmatprep.subr.mxu0 0.0
    %485 = vmatpush1.msra.mxu0 0.0
    %486 = vmatprep.subr.mxu0 0.0
    %487 = vmatpush1.msra.mxu0 0.0
    %488 = vmatprep.subr.mxu0 0.0
    %489 = vmatpush1.msra.mxu0 0.0
    %490 = vmatprep.subr.mxu0 0.0
    %491 = vmatpush1.msra.mxu0 0.0
    %492 = vmatprep.subr.mxu0 0.0
    %493 = vmatpush1.msra.mxu0 %v235
    %494 = vmatprep.subr.mxu0 0.0
    %495 = vmatpush1.msra.mxu0 %v230
    %496 = vmatprep.subr.mxu0 0.0
    %497 = vmatpush2.msra.mxu0 0.0
    %498 = vmatprep.subr.mxu0 0.0
    %499 = vmatpush2.msra.mxu0 0.0
    %500 = vmatprep.subr.mxu0 0.0
    %501 = vmatpush2.msra.mxu0 0.0
    %502 = vmatprep.subr.mxu0 0.0
    %503 = vmatpush2.msra.mxu0 0.0
    %504 = vmatprep.subr.mxu0 0.0
    %505 = vmatpush2.msra.mxu0 0.0
    %506 = vmatprep.subr.mxu0 0.0
    %507 = vmatpush2.msra.mxu0 0.0
    %508 = vmatprep.subr.mxu0 0.0
    %509 = vmatpush2.msra.mxu0 0.0
    %510 = vmatprep.subr.mxu0 0.0
    %511 = vmatpush2.msra.mxu0 0.0
    %512 = vmatprep.subr.mxu0 0.0
    %513 = vmatpush2.msra.mxu0 0.0
    %514 = vmatprep.subr.mxu0 0.0
    %515 = vmatpush2.msra.mxu0 0.0
    %516 = vmatprep.subr.mxu0 0.0
    %517 = vmatpush2.msra.mxu0 0.0
    %518 = vmatprep.subr.mxu0 0.0
    %519 = vmatpush2.msra.mxu0 0.0
    %520 = vmatprep.subr.mxu0 0.0
    %521 = vmatpush2.msra.mxu0 0.0
    %522 = vmatprep.subr.mxu0 0.0
    %523 = vmatpush2.msra.mxu0 0.0
    %524 = vmatprep.subr.mxu0 0.0
    %525 = vmatpush2.msra.mxu0 0.0
    %526 = vmatprep.subr.mxu0 0.0
    %527 = vmatpush2.msra.mxu0 0.0
    %528 = vmatprep.mubr.f32.mxu0 0.0
    %529 = vmatmul.mubr.f32.gmra.mxu0 %v459
    %v530 = vpop.f32.mrf.mxu0
    %v531 = vadd.f32 0.0, %v530
    %v532 = vpop.f32.mrf.mxu0
    %533 = vmatprep.mubr.f32.mxu0 0.0
    %534 = vmatmul.mubr.f32.gmra.mxu0 %v462
    %v535 = vpop.f32.mrf.mxu0
    %v536 = vadd.f32 0.0, %v535
    %v537 = vpop.f32.mrf.mxu0
    %538 = vdwg.mxu0
    %v540 = vsel %vm413, %v456, 0
    %v543 = vsel %vm413, %v457, 0
    %545 = vmatprep.subr.mxu0 0.0
    %546 = vmatpush1.msra.mxu0 0.0
    %547 = vmatprep.subr.mxu0 0.0
    %548 = vmatpush1.msra.mxu0 0.0
    %549 = vmatprep.subr.mxu0 0.0
    %550 = vmatpush1.msra.mxu0 0.0
    %551 = vmatprep.subr.mxu0 0.0
    %552 = vmatpush1.msra.mxu0 0.0
    %553 = vmatprep.subr.mxu0 0.0
    %554 = vmatpush1.msra.mxu0 0.0
    %555 = vmatprep.subr.mxu0 0.0
    %556 = vmatpush1.msra.mxu0 0.0
    %557 = vmatprep.subr.mxu0 0.0
    %558 = vmatpush1.msra.mxu0 0.0
    %559 = vmatprep.subr.mxu0 0.0
    %560 = vmatpush1.msra.mxu0 0.0
    %561 = vmatprep.subr.mxu0 0.0
    %562 = vmatpush1.msra.mxu0 0.0
    %563 = vmatprep.subr.mxu0 0.0
    %564 = vmatpush1.msra.mxu0 0.0
    %565 = vmatprep.subr.mxu0 0.0
    %566 = vmatpush1.msra.mxu0 0.0
    %567 = vmatprep.subr.mxu0 0.0
    %568 = vmatpush1.msra.mxu0 0.0
    %569 = vmatprep.subr.mxu0 0.0
    %570 = vmatpush1.msra.mxu0 0.0
    %571 = vmatprep.subr.mxu0 0.0
    %572 = vmatpush1.msra.mxu0 0.0
    %573 = vmatprep.subr.mxu0 0.0
    %574 = vmatpush1.msra.mxu0 %v245
    %575 = vmatprep.subr.mxu0 0.0
    %576 = vmatpush1.msra.mxu0 %v240
    %577 = vmatprep.subr.mxu0 0.0
    %578 = vmatpush2.msra.mxu0 0.0
    %579 = vmatprep.subr.mxu0 0.0
    %580 = vmatpush2.msra.mxu0 0.0
    %581 = vmatprep.subr.mxu0 0.0
    %582 = vmatpush2.msra.mxu0 0.0
    %583 = vmatprep.subr.mxu0 0.0
    %584 = vmatpush2.msra.mxu0 0.0
    %585 = vmatprep.subr.mxu0 0.0
    %586 = vmatpush2.msra.mxu0 0.0
    %587 = vmatprep.subr.mxu0 0.0
    %588 = vmatpush2.msra.mxu0 0.0
    %589 = vmatprep.subr.mxu0 0.0
    %590 = vmatpush2.msra.mxu0 0.0
    %591 = vmatprep.subr.mxu0 0.0
    %592 = vmatpush2.msra.mxu0 0.0
    %593 = vmatprep.subr.mxu0 0.0
    %594 = vmatpush2.msra.mxu0 0.0
    %595 = vmatprep.subr.mxu0 0.0
    %596 = vmatpush2.msra.mxu0 0.0
    %597 = vmatprep.subr.mxu0 0.0
    %598 = vmatpush2.msra.mxu0 0.0
    %599 = vmatprep.subr.mxu0 0.0
    %600 = vmatpush2.msra.mxu0 0.0
    %601 = vmatprep.subr.mxu0 0.0
    %602 = vmatpush2.msra.mxu0 0.0
    %603 = vmatprep.subr.mxu0 0.0
    %604 = vmatpush2.msra.mxu0 0.0
    %605 = vmatprep.subr.mxu0 0.0
    %606 = vmatpush2.msra.mxu0 0.0
    %607 = vmatprep.subr.mxu0 0.0
    %608 = vmatpush2.msra.mxu0 0.0
    %609 = vmatprep.mubr.f32.mxu0 0.0
    %610 = vmatmul.mubr.f32.gmra.mxu0 %v540
    %v611 = vpop.f32.mrf.mxu0
    %v612 = vadd.f32 0.0, %v611
    %v613 = vpop.f32.mrf.mxu0
    %614 = vmatprep.mubr.f32.mxu0 0.0
    %615 = vmatmul.mubr.f32.gmra.mxu0 %v543
    %v616 = vpop.f32.mrf.mxu0
    %v617 = vadd.f32 0.0, %v616
    %v618 = vpop.f32.mrf.mxu0
    %619 = vdwg.mxu0
    %vm620 = vcmask 64512
    %621 = vst.msk [vmem:[%s2] sm:$0xff] %vm620, %v531
    %622 = vst.msk [vmem:[%s2 + $0x8] sm:$0xff] %vm620, %v536
    %623 = vst.msk [vmem:[%s2 + $0x10] sm:$0xff] %vm620, %v612
    %624 = vst.msk [vmem:[%s2 + $0x18] sm:$0xff] %vm620, %v617
    // Predicated region
    $region18: #{tpu_custom_call.1} parent=1 // pred_check
      _
    $region19: #{tpu_custom_call.1} parent=1 // pred_check_branch
      %626 = sbr.rel (0) target = $region21
    $region20: #{tpu_custom_call.1} parent=1 // pred_region
      _
    $region21: #{tpu_custom_call.1} parent=1 // pred_fallthru
      _
    // Predicated region
    $region22: #{tpu_custom_call.1} parent=1 // pred_check
      _
    $region23: #{tpu_custom_call.1} parent=1 // pred_check_branch
      %628 = sbr.rel (0) target = $region25
    $region24: #{tpu_custom_call.1} parent=1 // pred_region
      _
    $region25: #{tpu_custom_call.1} parent=1 // pred_fallthru
      _
    %629 = vsyncpa [#allocation3], 1
    %630 = vsyncpa [#allocation5], 1

</llo_original>
